<compile_context>
chip_gen: v5e
topology: v5e:2x2
jax: 0.10.0
libtpu: 0.0.40
codegen_flags: <defaults>
</compile_context>

<pallas_src>
import jax
import jax.numpy as jnp
from jax.experimental import pallas as pl
from jax.experimental.pallas import tpu as pltpu

IN_SZ = 28 * 28      # 784
H0 = 256
H1 = 64
OUT = 10
OUT_PAD = 128        # lane-dense padded output width (cols 10..127 are zero)


def fcn2_kernel(x_ref, w0_ref, b0_ref, w1_ref, b1_ref, w2_ref, b2_ref, o_ref):
    # layer 0: (TB,784)bf16 @ (784,256)bf16 -> f32 acc; bias + ReLU in f32
    h0 = jnp.dot(x_ref[...], w0_ref[...], preferred_element_type=jnp.float32)
    h0 = jnp.maximum(h0 + b0_ref[...], 0.0)
    # layer 1: (TB,256) @ (256,64)
    h1 = jnp.dot(h0.astype(jnp.bfloat16), w1_ref[...],
                 preferred_element_type=jnp.float32)
    h1 = jnp.maximum(h1 + b1_ref[...], 0.0)
    # layer 2: (TB,64) @ (64,128)  -- padded N, unmasked lane-dense store
    o = jnp.dot(h1.astype(jnp.bfloat16), w2_ref[...],
                preferred_element_type=jnp.float32)
    o_ref[...] = (o + b2_ref[...]).astype(o_ref.dtype)


def _round_up(n, m):
    return ((n + m - 1) // m) * m


def fcn2_forward(x_nchw, params, *, tb=256):
    """x_nchw: (B, C, H, W) with C*H*W == 784. Returns (B, 10) float32."""
    B = x_nchw.shape[0]
    x = x_nchw.reshape(B, -1).astype(jnp.bfloat16)          # nn.Flatten() + bf16
    assert x.shape[1] == IN_SZ, f"expected {IN_SZ} features, got {x.shape[1]}"

    w0, b0, w1, b1, w2p, b2p = params   # bf16 weights, f32 biases, padded last layer

    # Batch tiling: TB rows per grid step (weights stay VMEM-resident).
    TB = min(tb, _round_up(B, 8))
    B_pad = _round_up(B, TB)
    if B_pad != B:
        x = jnp.pad(x, ((0, B_pad - B), (0, 0)))
    grid = (B_pad // TB,)

    flops = 2 * B_pad * (IN_SZ * H0 + H0 * H1 + H1 * OUT_PAD)
    bytes_accessed = (
        x.size * 2                                    # bf16 activations in
        + (w0.size + w1.size + w2p.size) * 2          # bf16 weights
        + (b0.size + b1.size + b2p.size) * 4          # f32 biases
        + B_pad * OUT_PAD * 4                         # f32 output
    )

    out = pl.pallas_call(
        fcn2_kernel,
        out_shape=jax.ShapeDtypeStruct((B_pad, OUT_PAD), jnp.float32),
        grid=grid,
        in_specs=[
            pl.BlockSpec((TB, IN_SZ), lambda i: (i, 0)),    # x: tiled over batch
            pl.BlockSpec((IN_SZ, H0), lambda i: (0, 0)),    # weights/biases: resident
            pl.BlockSpec((1, H0),     lambda i: (0, 0)),
            pl.BlockSpec((H0, H1),    lambda i: (0, 0)),
            pl.BlockSpec((1, H1),     lambda i: (0, 0)),
            pl.BlockSpec((H1, OUT_PAD), lambda i: (0, 0)),
            pl.BlockSpec((1, OUT_PAD),  lambda i: (0, 0)),
        ],
        out_specs=pl.BlockSpec((TB, OUT_PAD), lambda i: (i, 0)),
        compiler_params=pltpu.CompilerParams(
            dimension_semantics=("parallel",)),
        cost_estimate=pl.CostEstimate(
            flops=flops, transcendentals=0, bytes_accessed=bytes_accessed),
    )(x, w0, b0, w1, b1, w2p, b2p)

    return out[:B, :OUT]


def init_params(key):
    """nn.Linear-style U(-1/sqrt(fan_in), 1/sqrt(fan_in)) init.

    Weights stored (in, out) and cast to bf16; biases kept f32 as (1, out).
    The last layer is zero-padded from 10 to OUT_PAD output columns.
    """
    def linear(key, fan_in, fan_out):
        kw, kb = jax.random.split(key)
        bound = 1.0 / jnp.sqrt(jnp.float32(fan_in))
        w = jax.random.uniform(kw, (fan_in, fan_out), jnp.float32, -bound, bound)
        b = jax.random.uniform(kb, (1, fan_out), jnp.float32, -bound, bound)
        return w, b

    k0, k1, k2 = jax.random.split(key, 3)
    w0, b0 = linear(k0, IN_SZ, H0)
    w1, b1 = linear(k1, H0, H1)
    w2, b2 = linear(k2, H1, OUT)

    # lane-dense padding of the last layer (extra columns are exactly zero)
    w2p = jnp.zeros((H1, OUT_PAD), jnp.float32).at[:, :OUT].set(w2)
    b2p = jnp.zeros((1, OUT_PAD), jnp.float32).at[:, :OUT].set(b2)

    return (w0.astype(jnp.bfloat16), b0,
            w1.astype(jnp.bfloat16), b1,
            w2p.astype(jnp.bfloat16), b2p)


def fcn2_reference_bf16(x_nchw, params):
    """Pure-JAX reference with the same bf16 casts as the kernel."""
    w0, b0, w1, b1, w2p, b2p = params
    x = x_nchw.reshape(x_nchw.shape[0], -1).astype(jnp.bfloat16)
    h0 = jnp.maximum(jnp.dot(x, w0, preferred_element_type=jnp.float32) + b0, 0.0)
    h1 = jnp.maximum(jnp.dot(h0.astype(jnp.bfloat16), w1,
                             preferred_element_type=jnp.float32) + b1, 0.0)
    o = jnp.dot(h1.astype(jnp.bfloat16), w2p,
                preferred_element_type=jnp.float32) + b2p
    return o[:, :OUT]


def fcn2_reference_f32(x_nchw, params):
    """Full-f32 reference of the original PyTorch forward (for a loose check)."""
    w0, b0, w1, b1, w2p, b2p = params
    x = x_nchw.reshape(x_nchw.shape[0], -1).astype(jnp.float32)
    h0 = jnp.maximum(x @ w0.astype(jnp.float32) + b0, 0.0)
    h1 = jnp.maximum(h0 @ w1.astype(jnp.float32) + b1, 0.0)
    return (h1 @ w2p.astype(jnp.float32) + b2p)[:, :OUT]


if __name__ == "__main__":
    key = jax.random.PRNGKey(0)
    kx, kp = jax.random.split(key)

    B = 8
    x = jax.random.normal(kx, (B, 1, 28, 28), dtype=jnp.float32)  # MNIST-like NCHW
    params = init_params(kp)

    out = fcn2_forward(x, params)
    out = jax.block_until_ready(out)
    assert out.shape == (B, OUT), out.shape

    ref_bf16 = fcn2_reference_bf16(x, params)
    assert jnp.allclose(out, ref_bf16, atol=1e-2, rtol=1e-2), \
        "mismatch vs bf16-matched reference"

    ref_f32 = fcn2_reference_f32(x, params)
    assert jnp.allclose(out, ref_f32, atol=1e-1, rtol=1e-1), \
        "mismatch vs f32 reference (beyond bf16 tolerance)"

    print("KERNEL_OK")
</pallas_src>

<mosaic_0001>
module attributes {stable_mosaic.version = 11 : i64} {
  func.func @fcn2_kernel(%arg0: i32, %arg1: memref<8x784xbf16, #tpu.memory_space<vmem>>, %arg2: memref<784x256xbf16, #tpu.memory_space<vmem>>, %arg3: memref<1x256xf32, #tpu.memory_space<vmem>>, %arg4: memref<256x64xbf16, #tpu.memory_space<vmem>>, %arg5: memref<1x64xf32, #tpu.memory_space<vmem>>, %arg6: memref<64x128xbf16, #tpu.memory_space<vmem>>, %arg7: memref<1x128xf32, #tpu.memory_space<vmem>>, %arg8: memref<8x128xf32, #tpu.memory_space<vmem>>) attributes {dimension_semantics = [#tpu.dimension_semantics<parallel>], iteration_bounds = array<i64: 1>, scalar_prefetch = 0 : i64, scratch_operands = 0 : i64, tpu.core_type = #tpu.core_type<tc>, window_params = [{transform_indices = @transform_0, window_bounds = array<i64: 8, 784>}, {pipeline_mode = #tpu.pipeline_mode<synchronous>, transform_indices = @transform_1, window_bounds = array<i64: 784, 256>}, {pipeline_mode = #tpu.pipeline_mode<synchronous>, transform_indices = @transform_2, window_bounds = array<i64: 1, 256>}, {pipeline_mode = #tpu.pipeline_mode<synchronous>, transform_indices = @transform_3, window_bounds = array<i64: 256, 64>}, {pipeline_mode = #tpu.pipeline_mode<synchronous>, transform_indices = @transform_4, window_bounds = array<i64: 1, 64>}, {pipeline_mode = #tpu.pipeline_mode<synchronous>, transform_indices = @transform_5, window_bounds = array<i64: 64, 128>}, {pipeline_mode = #tpu.pipeline_mode<synchronous>, transform_indices = @transform_6, window_bounds = array<i64: 1, 128>}, {transform_indices = @transform_7, window_bounds = array<i64: 8, 128>}]} {
    %c0 = arith.constant 0 : index
    %c0_0 = arith.constant 0 : index
    %0 = vector.load %arg1[%c0, %c0_0] : memref<8x784xbf16, #tpu.memory_space<vmem>>, vector<8x784xbf16>
    %c0_1 = arith.constant 0 : index
    %c0_2 = arith.constant 0 : index
    %1 = vector.load %arg2[%c0_1, %c0_2] : memref<784x256xbf16, #tpu.memory_space<vmem>>, vector<784x256xbf16>
    %cst = arith.constant dense<0.000000e+00> : vector<8x256xf32>
    %2 = tpu.matmul %0, %1, %cst {dimension_numbers = #tpu.dot_dimension_numbers<[1], [0], [0], [1], [0, 0, 1, 1], [], []>} : vector<8x784xbf16>, vector<784x256xbf16>, vector<8x256xf32> -> vector<8x256xf32>
    %c0_3 = arith.constant 0 : index
    %c0_4 = arith.constant 0 : index
    %3 = vector.load %arg3[%c0_3, %c0_4] : memref<1x256xf32, #tpu.memory_space<vmem>>, vector<1x256xf32>
    %4 = vector.broadcast %3 : vector<1x256xf32> to vector<8x256xf32>
    %5 = arith.addf %2, %4 : vector<8x256xf32>
    %cst_5 = arith.constant 0.000000e+00 : f32
    %6 = vector.broadcast %cst_5 : f32 to vector<8x256xf32>
    %7 = arith.maximumf %5, %6 : vector<8x256xf32>
    %8 = arith.truncf %7 : vector<8x256xf32> to vector<8x256xbf16>
    %c0_6 = arith.constant 0 : index
    %c0_7 = arith.constant 0 : index
    %9 = vector.load %arg4[%c0_6, %c0_7] : memref<256x64xbf16, #tpu.memory_space<vmem>>, vector<256x64xbf16>
    %cst_8 = arith.constant dense<0.000000e+00> : vector<8x64xf32>
    %10 = tpu.matmul %8, %9, %cst_8 {dimension_numbers = #tpu.dot_dimension_numbers<[1], [0], [0], [1], [0, 0, 1, 1], [], []>} : vector<8x256xbf16>, vector<256x64xbf16>, vector<8x64xf32> -> vector<8x64xf32>
    %c0_9 = arith.constant 0 : index
    %c0_10 = arith.constant 0 : index
    %11 = vector.load %arg5[%c0_9, %c0_10] : memref<1x64xf32, #tpu.memory_space<vmem>>, vector<1x64xf32>
    %12 = vector.broadcast %11 : vector<1x64xf32> to vector<8x64xf32>
    %13 = arith.addf %10, %12 : vector<8x64xf32>
    %cst_11 = arith.constant 0.000000e+00 : f32
    %14 = vector.broadcast %cst_11 : f32 to vector<8x64xf32>
    %15 = arith.maximumf %13, %14 : vector<8x64xf32>
    %16 = arith.truncf %15 : vector<8x64xf32> to vector<8x64xbf16>
    %c0_12 = arith.constant 0 : index
    %c0_13 = arith.constant 0 : index
    %17 = vector.load %arg6[%c0_12, %c0_13] : memref<64x128xbf16, #tpu.memory_space<vmem>>, vector<64x128xbf16>
    %cst_14 = arith.constant dense<0.000000e+00> : vector<8x128xf32>
    %18 = tpu.matmul %16, %17, %cst_14 {dimension_numbers = #tpu.dot_dimension_numbers<[1], [0], [0], [1], [0, 0, 1, 1], [], []>} : vector<8x64xbf16>, vector<64x128xbf16>, vector<8x128xf32> -> vector<8x128xf32>
    %c0_15 = arith.constant 0 : index
    %c0_16 = arith.constant 0 : index
    %19 = vector.load %arg7[%c0_15, %c0_16] : memref<1x128xf32, #tpu.memory_space<vmem>>, vector<1x128xf32>
    %20 = vector.broadcast %19 : vector<1x128xf32> to vector<8x128xf32>
    %21 = arith.addf %18, %20 : vector<8x128xf32>
    %c0_17 = arith.constant 0 : index
    %c0_18 = arith.constant 0 : index
    %22 = vector.load %arg8[%c0_17, %c0_18] : memref<8x128xf32, #tpu.memory_space<vmem>>, vector<8x128xf32>
    tpu.vector_store %arg8[%c0_17, %c0_18], %21 {strides = array<i32>} : memref<8x128xf32, #tpu.memory_space<vmem>>, vector<8x128xf32>,
    return
  }
  func.func @transform_0(%arg0: i32) -> (i32, i32) {
    %c0_i32 = arith.constant 0 : i32
    %c0_i32_0 = arith.constant 0 : i32
    return %arg0, %c0_i32 : i32, i32
  }
  func.func @transform_1(%arg0: i32) -> (i32, i32) {
    %c0_i32 = arith.constant 0 : i32
    %c0_i32_0 = arith.constant 0 : i32
    %c0_i32_1 = arith.constant 0 : i32
    return %c0_i32, %c0_i32_0 : i32, i32
  }
  func.func @transform_2(%arg0: i32) -> (i32, i32) {
    %c0_i32 = arith.constant 0 : i32
    %c0_i32_0 = arith.constant 0 : i32
    %c0_i32_1 = arith.constant 0 : i32
    return %c0_i32, %c0_i32_0 : i32, i32
  }
  func.func @transform_3(%arg0: i32) -> (i32, i32) {
    %c0_i32 = arith.constant 0 : i32
    %c0_i32_0 = arith.constant 0 : i32
    %c0_i32_1 = arith.constant 0 : i32
    return %c0_i32, %c0_i32_0 : i32, i32
  }
  func.func @transform_4(%arg0: i32) -> (i32, i32) {
    %c0_i32 = arith.constant 0 : i32
    %c0_i32_0 = arith.constant 0 : i32
    %c0_i32_1 = arith.constant 0 : i32
    return %c0_i32, %c0_i32_0 : i32, i32
  }
  func.func @transform_5(%arg0: i32) -> (i32, i32) {
    %c0_i32 = arith.constant 0 : i32
    %c0_i32_0 = arith.constant 0 : i32
    %c0_i32_1 = arith.constant 0 : i32
    return %c0_i32, %c0_i32_0 : i32, i32
  }
  func.func @transform_6(%arg0: i32) -> (i32, i32) {
    %c0_i32 = arith.constant 0 : i32
    %c0_i32_0 = arith.constant 0 : i32
    %c0_i32_1 = arith.constant 0 : i32
    return %c0_i32, %c0_i32_0 : i32, i32
  }
  func.func @transform_7(%arg0: i32) -> (i32, i32) {
    %c0_i32 = arith.constant 0 : i32
    %c0_i32_0 = arith.constant 0 : i32
    return %arg0, %c0_i32 : i32, i32
  }
}

</mosaic_0001>

<llo_original>
// kernel: tpu_custom_call.1
$region0: #{tpu_custom_call.1}
  #allocation0 [shape = 'u32[]', space=smem, size = 0x4, offset = 0x4, fixed_abs, tag = 'smem constant byte address 0x4 - core index']
  #allocation1 [shape = 'u32[72,128]{1,0:T(1,128)}', space=vmem, size = 0x9000, scoped, tag = 'internal scratch']
  %s0 = inlined_call_operand.vmem [shape: bf16[8,784], index: 0, kind: input, shape index: {}]
  %s1 = inlined_call_operand.hbm [shape: bf16[784,256], index: 1, kind: input, shape index: {}]
  %s2 = inlined_call_operand.vmem [shape: f32[1,256], index: 2, kind: input, shape index: {}]
  %s3 = inlined_call_operand.vmem [shape: bf16[256,64], index: 3, kind: input, shape index: {}]
  %s4 = inlined_call_operand.vmem [shape: f32[1,64], index: 4, kind: input, shape index: {}]
  %s5 = inlined_call_operand.vmem [shape: bf16[64,128], index: 5, kind: input, shape index: {}]
  %s6 = inlined_call_operand.vmem [shape: f32[1,128], index: 6, kind: input, shape index: {}]
  %s7 = inlined_call_operand.hbm [shape: f32[8,128], index: 7, kind: output, shape index: {}]
  %s8 = sld [smem:[#allocation0]]
  $region42: #{tpu_custom_call.1} parent=0
    _
  %s10 = ssub.s32 1, %s8
  %s11 = scalar_select 0, %s10, %s8
  $region1: #{tpu_custom_call.1} parent=0
    #allocation2 [shape = 'u8[401408]{0}', space=vmem, size = 0x62000, scoped, tag = 'input window, operand 1, single buffered']
    #allocation3 [shape = 's32[1]{0}', space=sflag, size = 0x4, scoped, tag = 'scoped memory for tpu_custom_call.1']
    #allocation4 [shape = 's32[1]{0}', space=sflag, size = 0x4, scoped, tag = 'scoped memory for tpu_custom_call.1']
    #allocation5 [shape = 'u8[4096]{0}', space=vmem, size = 0x1000, scoped, tag = 'output window, operand 0, single buffered']
    %12 = vsyncpa [#allocation3], 0
    %13 = vsyncpa [#allocation4], 0
    // Predicated region
    $region2: #{tpu_custom_call.1} parent=1 // pred_check
      _
    $region3: #{tpu_custom_call.1} parent=1 // pred_check_branch
      %15 = sbr.rel (0) target = $region5
    $region4: #{tpu_custom_call.1} parent=1 // pred_region
      _
    $region5: #{tpu_custom_call.1} parent=1 // pred_fallthru
      _
    // Predicated region
    $region6: #{tpu_custom_call.1} parent=1 // pred_check
      _
    $region7: #{tpu_custom_call.1} parent=1 // pred_check_branch
      %17 = sbr.rel (0) target = $region9
    $region8: #{tpu_custom_call.1} parent=1 // pred_region
      %19 = vsyncadd [#allocation3], 0
      %s20 = sshll.u32 %s1, 4
      %s21 = int_to_ptr.hbm [resolvable:$true] %s20
      %s22 = sshll.u32 [#allocation2], 4
      %s23 = int_to_ptr.vmem [resolvable:$true] %s22
      %28 = dma.hbm_to_vmem [thread:$0]  %s21, 12544, %s23, [#allocation3], 128, 128, 8
    $region9: #{tpu_custom_call.1} parent=1 // pred_fallthru
      _
    // Predicated region
    $region10: #{tpu_custom_call.1} parent=1 // pred_check
      _
    $region11: #{tpu_custom_call.1} parent=1 // pred_check_branch
      %30 = sbr.rel (0) target = $region13
    $region12: #{tpu_custom_call.1} parent=1 // pred_region
      _
    $region13: #{tpu_custom_call.1} parent=1 // pred_fallthru
      _
    // Predicated region
    $region14: #{tpu_custom_call.1} parent=1 // pred_check
      _
    $region15: #{tpu_custom_call.1} parent=1 // pred_check_branch
      %32 = sbr.rel (0) target = $region17
    $region16: #{tpu_custom_call.1} parent=1 // pred_region
      _
    $region17: #{tpu_custom_call.1} parent=1 // pred_fallthru
      _
    // Predicated region
    $region18: #{tpu_custom_call.1} parent=1 // pred_check
      _
    $region19: #{tpu_custom_call.1} parent=1 // pred_check_branch
      %34 = sbr.rel (0) target = $region21
    $region20: #{tpu_custom_call.1} parent=1 // pred_region
      _
    $region21: #{tpu_custom_call.1} parent=1 // pred_fallthru
      _
    // Predicated region
    $region22: #{tpu_custom_call.1} parent=1 // pred_check
      _
    $region23: #{tpu_custom_call.1} parent=1 // pred_check_branch
      %36 = sbr.rel (0) target = $region25
    $region24: #{tpu_custom_call.1} parent=1 // pred_region
      _
    $region25: #{tpu_custom_call.1} parent=1 // pred_fallthru
      _
    // Predicated region
    $region26: #{tpu_custom_call.1} parent=1 // pred_check
      _
    $region27: #{tpu_custom_call.1} parent=1 // pred_check_branch
      %38 = sbr.rel (0) target = $region29
    $region28: #{tpu_custom_call.1} parent=1 // pred_region
      _
    $region29: #{tpu_custom_call.1} parent=1 // pred_fallthru
      _
    // Predicated region
    $region30: #{tpu_custom_call.1} parent=1 // pred_check
      _
    $region31: #{tpu_custom_call.1} parent=1 // pred_check_branch
      %40 = sbr.rel (0) target = $region33
    $region32: #{tpu_custom_call.1} parent=1 // pred_region
      %42 = dma.done [#allocation3], 12544
    $region33: #{tpu_custom_call.1} parent=1 // pred_fallthru
      _
    %v44 = vld [vmem:[%s0] sm:$0xff]
    %v45 = vld [vmem:[%s0 + $0x8] sm:$0xff]
    %v46 = vld [vmem:[%s0 + $0x10] sm:$0xff]
    %v47 = vld [vmem:[%s0 + $0x18] sm:$0xf]
    %v48 = vld [vmem:[#allocation2] sm:$0xff]
    %v49 = vld [vmem:[#allocation2 + $0x8] sm:$0xff]
    %v50 = vld [vmem:[#allocation2 + $0x10] sm:$0xff]
    %v51 = vld [vmem:[#allocation2 + $0x18] sm:$0xff]
    %v52 = vld [vmem:[#allocation2 + $0x20] sm:$0xff]
    %v53 = vld [vmem:[#allocation2 + $0x28] sm:$0xff]
    %v54 = vld [vmem:[#allocation2 + $0x30] sm:$0xff]
    %v55 = vld [vmem:[#allocation2 + $0x38] sm:$0xff]
    %v56 = vld [vmem:[#allocation2 + $0x40] sm:$0xff]
    %v57 = vld [vmem:[#allocation2 + $0x48] sm:$0xff]
    %v58 = vld [vmem:[#allocation2 + $0x50] sm:$0xff]
    %v59 = vld [vmem:[#allocation2 + $0x58] sm:$0xff]
    %v60 = vld [vmem:[#allocation2 + $0x60] sm:$0xff]
    %v61 = vld [vmem:[#allocation2 + $0x68] sm:$0xff]
    %v62 = vld [vmem:[#allocation2 + $0x70] sm:$0xff]
    %v63 = vld [vmem:[#allocation2 + $0x78] sm:$0xff]
    %v64 = vld [vmem:[#allocation2 + $0x80] sm:$0xff]
    %v65 = vld [vmem:[#allocation2 + $0x88] sm:$0xff]
    %v66 = vld [vmem:[#allocation2 + $0x90] sm:$0xff]
    %v67 = vld [vmem:[#allocation2 + $0x98] sm:$0xff]
    %v68 = vld [vmem:[#allocation2 + $0xa0] sm:$0xff]
    %v69 = vld [vmem:[#allocation2 + $0xa8] sm:$0xff]
    %v70 = vld [vmem:[#allocation2 + $0xb0] sm:$0xff]
    %v71 = vld [vmem:[#allocation2 + $0xb8] sm:$0xff]
    %v72 = vld [vmem:[#allocation2 + $0xc0] sm:$0xff]
    %v73 = vld [vmem:[#allocation2 + $0xc8] sm:$0xff]
    %v74 = vld [vmem:[#allocation2 + $0xd0] sm:$0xff]
    %v75 = vld [vmem:[#allocation2 + $0xd8] sm:$0xff]
    %v76 = vld [vmem:[#allocation2 + $0xe0] sm:$0xff]
    %v77 = vld [vmem:[#allocation2 + $0xe8] sm:$0xff]
    %v78 = vld [vmem:[#allocation2 + $0xf0] sm:$0xff]
    %v79 = vld [vmem:[#allocation2 + $0xf8] sm:$0xff]
    %v80 = vld [vmem:[#allocation2 + $0x100] sm:$0xff]
    %v81 = vld [vmem:[#allocation2 + $0x108] sm:$0xff]
    %v82 = vld [vmem:[#allocation2 + $0x110] sm:$0xff]
    %v83 = vld [vmem:[#allocation2 + $0x118] sm:$0xff]
    %v84 = vld [vmem:[#allocation2 + $0x120] sm:$0xff]
    %v85 = vld [vmem:[#allocation2 + $0x128] sm:$0xff]
    %v86 = vld [vmem:[#allocation2 + $0x130] sm:$0xff]
    %v87 = vld [vmem:[#allocation2 + $0x138] sm:$0xff]
    %v88 = vld [vmem:[#allocation2 + $0x140] sm:$0xff]
    %v89 = vld [vmem:[#allocation2 + $0x148] sm:$0xff]
    %v90 = vld [vmem:[#allocation2 + $0x150] sm:$0xff]
    %v91 = vld [vmem:[#allocation2 + $0x158] sm:$0xff]
    %v92 = vld [vmem:[#allocation2 + $0x160] sm:$0xff]
    %v93 = vld [vmem:[#allocation2 + $0x168] sm:$0xff]
    %v94 = vld [vmem:[#allocation2 + $0x170] sm:$0xff]
    %v95 = vld [vmem:[#allocation2 + $0x178] sm:$0xff]
    %v96 = vld [vmem:[#allocation2 + $0x180] sm:$0xff]
    %v97 = vld [vmem:[#allocation2 + $0x188] sm:$0xff]
    %v98 = vld [vmem:[#allocation2 + $0x190] sm:$0xff]
    %v99 = vld [vmem:[#allocation2 + $0x198] sm:$0xff]
    %v100 = vld [vmem:[#allocation2 + $0x1a0] sm:$0xff]
    %v101 = vld [vmem:[#allocation2 + $0x1a8] sm:$0xff]
    %v102 = vld [vmem:[#allocation2 + $0x1b0] sm:$0xff]
    %v103 = vld [vmem:[#allocation2 + $0x1b8] sm:$0xff]
    %v104 = vld [vmem:[#allocation2 + $0x1c0] sm:$0xff]
    %v105 = vld [vmem:[#allocation2 + $0x1c8] sm:$0xff]
    %v106 = vld [vmem:[#allocation2 + $0x1d0] sm:$0xff]
    %v107 = vld [vmem:[#allocation2 + $0x1d8] sm:$0xff]
    %v108 = vld [vmem:[#allocation2 + $0x1e0] sm:$0xff]
    %v109 = vld [vmem:[#allocation2 + $0x1e8] sm:$0xff]
    %v110 = vld [vmem:[#allocation2 + $0x1f0] sm:$0xff]
    %v111 = vld [vmem:[#allocation2 + $0x1f8] sm:$0xff]
    %v112 = vld [vmem:[#allocation2 + $0x200] sm:$0xff]
    %v113 = vld [vmem:[#allocation2 + $0x208] sm:$0xff]
    %v114 = vld [vmem:[#allocation2 + $0x210] sm:$0xff]
    %v115 = vld [vmem:[#allocation2 + $0x218] sm:$0xff]
    %v116 = vld [vmem:[#allocation2 + $0x220] sm:$0xff]
    %v117 = vld [vmem:[#allocation2 + $0x228] sm:$0xff]
    %v118 = vld [vmem:[#allocation2 + $0x230] sm:$0xff]
    %v119 = vld [vmem:[#allocation2 + $0x238] sm:$0xff]
    %v120 = vld [vmem:[#allocation2 + $0x240] sm:$0xff]
    %v121 = vld [vmem:[#allocation2 + $0x248] sm:$0xff]
    %v122 = vld [vmem:[#allocation2 + $0x250] sm:$0xff]
    %v123 = vld [vmem:[#allocation2 + $0x258] sm:$0xff]
    %v124 = vld [vmem:[#allocation2 + $0x260] sm:$0xff]
    %v125 = vld [vmem:[#allocation2 + $0x268] sm:$0xff]
    %v126 = vld [vmem:[#allocation2 + $0x270] sm:$0xff]
    %v127 = vld [vmem:[#allocation2 + $0x278] sm:$0xff]
    %v128 = vld [vmem:[#allocation2 + $0x280] sm:$0xff]
    %v129 = vld [vmem:[#allocation2 + $0x288] sm:$0xff]
    %v130 = vld [vmem:[#allocation2 + $0x290] sm:$0xff]
    %v131 = vld [vmem:[#allocation2 + $0x298] sm:$0xff]
    %v132 = vld [vmem:[#allocation2 + $0x2a0] sm:$0xff]
    %v133 = vld [vmem:[#allocation2 + $0x2a8] sm:$0xff]
    %v134 = vld [vmem:[#allocation2 + $0x2b0] sm:$0xff]
    %v135 = vld [vmem:[#allocation2 + $0x2b8] sm:$0xff]
    %v136 = vld [vmem:[#allocation2 + $0x2c0] sm:$0xff]
    %v137 = vld [vmem:[#allocation2 + $0x2c8] sm:$0xff]
    %v138 = vld [vmem:[#allocation2 + $0x2d0] sm:$0xff]
    %v139 = vld [vmem:[#allocation2 + $0x2d8] sm:$0xff]
    %v140 = vld [vmem:[#allocation2 + $0x2e0] sm:$0xff]
    %v141 = vld [vmem:[#allocation2 + $0x2e8] sm:$0xff]
    %v142 = vld [vmem:[#allocation2 + $0x2f0] sm:$0xff]
    %v143 = vld [vmem:[#allocation2 + $0x2f8] sm:$0xff]
    %v144 = vld [vmem:[#allocation2 + $0x300] sm:$0xff]
    %v145 = vld [vmem:[#allocation2 + $0x308] sm:$0xff]
    %v146 = vld [vmem:[%s2] sm:$0x3]
    %v148 = vperm.slane %v146, 0
    %v149 = vperm.slane %v146, 1
    %v156 = vunpack.c.l.b16 %v44
    %v157 = vunpack.c.h.b16 %v44
    %v158 = vunpack.c.l.b16 %v45
    %v159 = vunpack.c.h.b16 %v45
    %v160 = vunpack.c.l.b16 %v46
    %v161 = vunpack.c.h.b16 %v46
    %v162 = vunpack.c.l.b16 %v47
    %v163 = vpack.c.b16 %v156, %v156
    %v164 = vpack.c.b16 %v157, %v157
    %v165 = vpack.c.b16 %v158, %v158
    %v166 = vpack.c.b16 %v159, %v159
    %v167 = vpack.c.b16 %v160, %v160
    %v168 = vpack.c.b16 %v161, %v161
    %v169 = vpack.c.b16 %v162, %v162
    %v274 = vunpack.c.l.b16 %v48
    %v275 = vunpack.c.h.b16 %v48
    %v276 = vunpack.c.l.b16 %v49
    %v277 = vunpack.c.h.b16 %v49
    %v278 = vunpack.c.l.b16 %v50
    %v279 = vunpack.c.h.b16 %v50
    %v280 = vunpack.c.l.b16 %v51
    %v281 = vunpack.c.h.b16 %v51
    %v282 = vunpack.c.l.b16 %v52
    %v283 = vunpack.c.h.b16 %v52
    %v284 = vunpack.c.l.b16 %v53
    %v285 = vunpack.c.h.b16 %v53
    %v286 = vunpack.c.l.b16 %v54
    %v287 = vunpack.c.h.b16 %v54
    %v288 = vunpack.c.l.b16 %v55
    %v289 = vunpack.c.h.b16 %v55
    %v290 = vunpack.c.l.b16 %v56
    %v291 = vunpack.c.h.b16 %v56
    %v292 = vunpack.c.l.b16 %v57
    %v293 = vunpack.c.h.b16 %v57
    %v294 = vunpack.c.l.b16 %v58
    %v295 = vunpack.c.h.b16 %v58
    %v296 = vunpack.c.l.b16 %v59
    %v297 = vunpack.c.h.b16 %v59
    %v298 = vunpack.c.l.b16 %v60
    %v299 = vunpack.c.h.b16 %v60
    %v300 = vunpack.c.l.b16 %v61
    %v301 = vunpack.c.h.b16 %v61
    %v302 = vunpack.c.l.b16 %v62
    %v303 = vunpack.c.h.b16 %v62
    %v304 = vunpack.c.l.b16 %v63
    %v305 = vunpack.c.h.b16 %v63
    %v306 = vunpack.c.l.b16 %v64
    %v307 = vunpack.c.h.b16 %v64
    %v308 = vunpack.c.l.b16 %v65
    %v309 = vunpack.c.h.b16 %v65
    %v310 = vunpack.c.l.b16 %v66
    %v311 = vunpack.c.h.b16 %v66
    %v312 = vunpack.c.l.b16 %v67
    %v313 = vunpack.c.h.b16 %v67
    %v314 = vunpack.c.l.b16 %v68
    %v315 = vunpack.c.h.b16 %v68
    %v316 = vunpack.c.l.b16 %v69
    %v317 = vunpack.c.h.b16 %v69
    %v318 = vunpack.c.l.b16 %v70
    %v319 = vunpack.c.h.b16 %v70
    %v320 = vunpack.c.l.b16 %v71
    %v321 = vunpack.c.h.b16 %v71
    %v322 = vunpack.c.l.b16 %v72
    %v323 = vunpack.c.h.b16 %v72
    %v324 = vunpack.c.l.b16 %v73
    %v325 = vunpack.c.h.b16 %v73
    %v326 = vunpack.c.l.b16 %v74
    %v327 = vunpack.c.h.b16 %v74
    %v328 = vunpack.c.l.b16 %v75
    %v329 = vunpack.c.h.b16 %v75
    %v330 = vunpack.c.l.b16 %v76
    %v331 = vunpack.c.h.b16 %v76
    %v332 = vunpack.c.l.b16 %v77
    %v333 = vunpack.c.h.b16 %v77
    %v334 = vunpack.c.l.b16 %v78
    %v335 = vunpack.c.h.b16 %v78
    %v336 = vunpack.c.l.b16 %v79
    %v337 = vunpack.c.h.b16 %v79
    %v338 = vunpack.c.l.b16 %v80
    %v339 = vunpack.c.h.b16 %v80
    %v340 = vunpack.c.l.b16 %v81
    %v341 = vunpack.c.h.b16 %v81
    %v342 = vunpack.c.l.b16 %v82
    %v343 = vunpack.c.h.b16 %v82
    %v344 = vunpack.c.l.b16 %v83
    %v345 = vunpack.c.h.b16 %v83
    %v346 = vunpack.c.l.b16 %v84
    %v347 = vunpack.c.h.b16 %v84
    %v348 = vunpack.c.l.b16 %v85
    %v349 = vunpack.c.h.b16 %v85
    %v350 = vunpack.c.l.b16 %v86
    %v351 = vunpack.c.h.b16 %v86
    %v352 = vunpack.c.l.b16 %v87
    %v353 = vunpack.c.h.b16 %v87
    %v354 = vunpack.c.l.b16 %v88
    %v355 = vunpack.c.h.b16 %v88
    %v356 = vunpack.c.l.b16 %v89
    %v357 = vunpack.c.h.b16 %v89
    %v358 = vunpack.c.l.b16 %v90
    %v359 = vunpack.c.h.b16 %v90
    %v360 = vunpack.c.l.b16 %v91
    %v361 = vunpack.c.h.b16 %v91
    %v362 = vunpack.c.l.b16 %v92
    %v363 = vunpack.c.h.b16 %v92
    %v364 = vunpack.c.l.b16 %v93
    %v365 = vunpack.c.h.b16 %v93
    %v366 = vunpack.c.l.b16 %v94
    %v367 = vunpack.c.h.b16 %v94
    %v368 = vunpack.c.l.b16 %v95
    %v369 = vunpack.c.h.b16 %v95
    %v370 = vunpack.c.l.b16 %v96
    %v371 = vunpack.c.h.b16 %v96
    %v372 = vunpack.c.l.b16 %v97
    %v373 = vunpack.c.h.b16 %v97
    %v374 = vunpack.c.l.b16 %v98
    %v375 = vunpack.c.h.b16 %v98
    %v376 = vunpack.c.l.b16 %v99
    %v377 = vunpack.c.h.b16 %v99
    %v378 = vunpack.c.l.b16 %v100
    %v379 = vunpack.c.h.b16 %v100
    %v380 = vunpack.c.l.b16 %v101
    %v381 = vunpack.c.h.b16 %v101
    %v382 = vunpack.c.l.b16 %v102
    %v383 = vunpack.c.h.b16 %v102
    %v384 = vunpack.c.l.b16 %v103
    %v385 = vunpack.c.h.b16 %v103
    %v386 = vunpack.c.l.b16 %v104
    %v387 = vunpack.c.h.b16 %v104
    %v388 = vunpack.c.l.b16 %v105
    %v389 = vunpack.c.h.b16 %v105
    %v390 = vunpack.c.l.b16 %v106
    %v391 = vunpack.c.h.b16 %v106
    %v392 = vunpack.c.l.b16 %v107
    %v393 = vunpack.c.h.b16 %v107
    %v394 = vunpack.c.l.b16 %v108
    %v395 = vunpack.c.h.b16 %v108
    %v396 = vunpack.c.l.b16 %v109
    %v397 = vunpack.c.h.b16 %v109
    %v398 = vunpack.c.l.b16 %v110
    %v399 = vunpack.c.h.b16 %v110
    %v400 = vunpack.c.l.b16 %v111
    %v401 = vunpack.c.h.b16 %v111
    %v402 = vunpack.c.l.b16 %v112
    %v403 = vunpack.c.h.b16 %v112
    %v404 = vunpack.c.l.b16 %v113
    %v405 = vunpack.c.h.b16 %v113
    %v406 = vunpack.c.l.b16 %v114
    %v407 = vunpack.c.h.b16 %v114
    %v408 = vunpack.c.l.b16 %v115
    %v409 = vunpack.c.h.b16 %v115
    %v410 = vunpack.c.l.b16 %v116
    %v411 = vunpack.c.h.b16 %v116
    %v412 = vunpack.c.l.b16 %v117
    %v413 = vunpack.c.h.b16 %v117
    %v414 = vunpack.c.l.b16 %v118
    %v415 = vunpack.c.h.b16 %v118
    %v416 = vunpack.c.l.b16 %v119
    %v417 = vunpack.c.h.b16 %v119
    %v418 = vunpack.c.l.b16 %v120
    %v419 = vunpack.c.h.b16 %v120
    %v420 = vunpack.c.l.b16 %v121
    %v421 = vunpack.c.h.b16 %v121
    %v422 = vunpack.c.l.b16 %v122
    %v423 = vunpack.c.h.b16 %v122
    %v424 = vunpack.c.l.b16 %v123
    %v425 = vunpack.c.h.b16 %v123
    %v426 = vunpack.c.l.b16 %v124
    %v427 = vunpack.c.h.b16 %v124
    %v428 = vunpack.c.l.b16 %v125
    %v429 = vunpack.c.h.b16 %v125
    %v430 = vunpack.c.l.b16 %v126
    %v431 = vunpack.c.h.b16 %v126
    %v432 = vunpack.c.l.b16 %v127
    %v433 = vunpack.c.h.b16 %v127
    %v434 = vunpack.c.l.b16 %v128
    %v435 = vunpack.c.h.b16 %v128
    %v436 = vunpack.c.l.b16 %v129
    %v437 = vunpack.c.h.b16 %v129
    %v438 = vunpack.c.l.b16 %v130
    %v439 = vunpack.c.h.b16 %v130
    %v440 = vunpack.c.l.b16 %v131
    %v441 = vunpack.c.h.b16 %v131
    %v442 = vunpack.c.l.b16 %v132
    %v443 = vunpack.c.h.b16 %v132
    %v444 = vunpack.c.l.b16 %v133
    %v445 = vunpack.c.h.b16 %v133
    %v446 = vunpack.c.l.b16 %v134
    %v447 = vunpack.c.h.b16 %v134
    %v448 = vunpack.c.l.b16 %v135
    %v449 = vunpack.c.h.b16 %v135
    %v450 = vunpack.c.l.b16 %v136
    %v451 = vunpack.c.h.b16 %v136
    %v452 = vunpack.c.l.b16 %v137
    %v453 = vunpack.c.h.b16 %v137
    %v454 = vunpack.c.l.b16 %v138
    %v455 = vunpack.c.h.b16 %v138
    %v456 = vunpack.c.l.b16 %v139
    %v457 = vunpack.c.h.b16 %v139
    %v458 = vunpack.c.l.b16 %v140
    %v459 = vunpack.c.h.b16 %v140
    %v460 = vunpack.c.l.b16 %v141
    %v461 = vunpack.c.h.b16 %v141
    %v462 = vunpack.c.l.b16 %v142
    %v463 = vunpack.c.h.b16 %v142
    %v464 = vunpack.c.l.b16 %v143
    %v465 = vunpack.c.h.b16 %v143
    %v466 = vunpack.c.l.b16 %v144
    %v467 = vunpack.c.h.b16 %v144
    %v468 = vunpack.c.l.b16 %v145
    %v469 = vunpack.c.h.b16 %v145
    %v470 = vpack.c.b16 %v276, %v274
    %v471 = vpack.c.b16 %v277, %v275
    %v472 = vpack.c.b16 %v280, %v278
    %v473 = vpack.c.b16 %v281, %v279
    %v474 = vpack.c.b16 %v284, %v282
    %v475 = vpack.c.b16 %v285, %v283
    %v476 = vpack.c.b16 %v288, %v286
    %v477 = vpack.c.b16 %v289, %v287
    %v478 = vpack.c.b16 %v292, %v290
    %v479 = vpack.c.b16 %v293, %v291
    %v480 = vpack.c.b16 %v296, %v294
    %v481 = vpack.c.b16 %v297, %v295
    %v482 = vpack.c.b16 %v300, %v298
    %v483 = vpack.c.b16 %v301, %v299
    %v484 = vpack.c.b16 %v304, %v302
    %v485 = vpack.c.b16 %v305, %v303
    %v486 = vpack.c.b16 %v308, %v306
    %v487 = vpack.c.b16 %v309, %v307
    %v488 = vpack.c.b16 %v312, %v310
    %v489 = vpack.c.b16 %v313, %v311
    %v490 = vpack.c.b16 %v316, %v314
    %v491 = vpack.c.b16 %v317, %v315
    %v492 = vpack.c.b16 %v320, %v318
    %v493 = vpack.c.b16 %v321, %v319
    %v494 = vpack.c.b16 %v324, %v322
    %v495 = vpack.c.b16 %v325, %v323
    %v496 = vpack.c.b16 %v328, %v326
    %v497 = vpack.c.b16 %v329, %v327
    %v498 = vpack.c.b16 %v332, %v330
    %v499 = vpack.c.b16 %v333, %v331
    %v500 = vpack.c.b16 %v336, %v334
    %v501 = vpack.c.b16 %v337, %v335
    %v502 = vpack.c.b16 %v340, %v338
    %v503 = vpack.c.b16 %v341, %v339
    %v504 = vpack.c.b16 %v344, %v342
    %v505 = vpack.c.b16 %v345, %v343
    %v506 = vpack.c.b16 %v348, %v346
    %v507 = vpack.c.b16 %v349, %v347
    %v508 = vpack.c.b16 %v352, %v350
    %v509 = vpack.c.b16 %v353, %v351
    %v510 = vpack.c.b16 %v356, %v354
    %v511 = vpack.c.b16 %v357, %v355
    %v512 = vpack.c.b16 %v360, %v358
    %v513 = vpack.c.b16 %v361, %v359
    %v514 = vpack.c.b16 %v364, %v362
    %v515 = vpack.c.b16 %v365, %v363
    %v516 = vpack.c.b16 %v368, %v366
    %v517 = vpack.c.b16 %v369, %v367
    %v518 = vpack.c.b16 %v372, %v370
    %v519 = vpack.c.b16 %v373, %v371
    %v520 = vpack.c.b16 %v376, %v374
    %v521 = vpack.c.b16 %v377, %v375
    %v522 = vpack.c.b16 %v380, %v378
    %v523 = vpack.c.b16 %v381, %v379
    %v524 = vpack.c.b16 %v384, %v382
    %v525 = vpack.c.b16 %v385, %v383
    %v526 = vpack.c.b16 %v388, %v386
    %v527 = vpack.c.b16 %v389, %v387
    %v528 = vpack.c.b16 %v392, %v390
    %v529 = vpack.c.b16 %v393, %v391
    %v530 = vpack.c.b16 %v396, %v394
    %v531 = vpack.c.b16 %v397, %v395
    %v532 = vpack.c.b16 %v400, %v398
    %v533 = vpack.c.b16 %v401, %v399
    %v534 = vpack.c.b16 %v404, %v402
    %v535 = vpack.c.b16 %v405, %v403
    %v536 = vpack.c.b16 %v408, %v406
    %v537 = vpack.c.b16 %v409, %v407
    %v538 = vpack.c.b16 %v412, %v410
    %v539 = vpack.c.b16 %v413, %v411
    %v540 = vpack.c.b16 %v416, %v414
    %v541 = vpack.c.b16 %v417, %v415
    %v542 = vpack.c.b16 %v420, %v418
    %v543 = vpack.c.b16 %v421, %v419
    %v544 = vpack.c.b16 %v424, %v422
    %v545 = vpack.c.b16 %v425, %v423
    %v546 = vpack.c.b16 %v428, %v426
    %v547 = vpack.c.b16 %v429, %v427
    %v548 = vpack.c.b16 %v432, %v430
    %v549 = vpack.c.b16 %v433, %v431
    %v550 = vpack.c.b16 %v436, %v434
    %v551 = vpack.c.b16 %v437, %v435
    %v552 = vpack.c.b16 %v440, %v438
    %v553 = vpack.c.b16 %v441, %v439
    %v554 = vpack.c.b16 %v444, %v442
    %v555 = vpack.c.b16 %v445, %v443
    %v556 = vpack.c.b16 %v448, %v446
    %v557 = vpack.c.b16 %v449, %v447
    %v558 = vpack.c.b16 %v452, %v450
    %v559 = vpack.c.b16 %v453, %v451
    %v560 = vpack.c.b16 %v456, %v454
    %v561 = vpack.c.b16 %v457, %v455
    %v562 = vpack.c.b16 %v460, %v458
    %v563 = vpack.c.b16 %v461, %v459
    %v564 = vpack.c.b16 %v464, %v462
    %v565 = vpack.c.b16 %v465, %v463
    %v566 = vpack.c.b16 %v468, %v466
    %v567 = vpack.c.b16 %v469, %v467
    %vm666 = vcmask 130048
    %v668 = vsel %vm666, %v169, 0
    %670 = vmatpush.bf16.msra.mxu0 %v484
    %671 = vmatpush.bf16.msra.mxu0 %v482
    %672 = vmatpush.bf16.msra.mxu0 %v480
    %673 = vmatpush.bf16.msra.mxu0 %v478
    %674 = vmatpush.bf16.msra.mxu0 %v476
    %675 = vmatpush.bf16.msra.mxu0 %v474
    %676 = vmatpush.bf16.msra.mxu0 %v472
    %677 = vmatpush.bf16.msra.mxu0 %v470
    %678 = vmatmul.bf16.gmra.mxu0 %v163
    %v679 = vpop.f32.mrf.mxu0
    %v680 = vadd.f32 %v148, %v679
    %v681 = vpop.f32.mrf.mxu0
    %682 = vdwg.mxu0
    %683 = vmatpush.bf16.msra.mxu0 %v500
    %684 = vmatpush.bf16.msra.mxu0 %v498
    %685 = vmatpush.bf16.msra.mxu0 %v496
    %686 = vmatpush.bf16.msra.mxu0 %v494
    %687 = vmatpush.bf16.msra.mxu0 %v492
    %688 = vmatpush.bf16.msra.mxu0 %v490
    %689 = vmatpush.bf16.msra.mxu0 %v488
    %690 = vmatpush.bf16.msra.mxu0 %v486
    %691 = vmatmul.bf16.gmra.mxu0 %v164
    %v692 = vpop.f32.mrf.mxu0
    %v693 = vadd.f32 %v680, %v692
    %v694 = vpop.f32.mrf.mxu0
    %695 = vdwg.mxu0
    %696 = vmatpush.bf16.msra.mxu0 %v516
    %697 = vmatpush.bf16.msra.mxu0 %v514
    %698 = vmatpush.bf16.msra.mxu0 %v512
    %699 = vmatpush.bf16.msra.mxu0 %v510
    %700 = vmatpush.bf16.msra.mxu0 %v508
    %701 = vmatpush.bf16.msra.mxu0 %v506
    %702 = vmatpush.bf16.msra.mxu0 %v504
    %703 = vmatpush.bf16.msra.mxu0 %v502
    %704 = vmatmul.bf16.gmra.mxu0 %v165
    %v705 = vpop.f32.mrf.mxu0
    %v706 = vadd.f32 %v693, %v705
    %v707 = vpop.f32.mrf.mxu0
    %708 = vdwg.mxu0
    %709 = vmatpush.bf16.msra.mxu0 %v532
    %710 = vmatpush.bf16.msra.mxu0 %v530
    %711 = vmatpush.bf16.msra.mxu0 %v528
    %712 = vmatpush.bf16.msra.mxu0 %v526
    %713 = vmatpush.bf16.msra.mxu0 %v524
    %714 = vmatpush.bf16.msra.mxu0 %v522
    %715 = vmatpush.bf16.msra.mxu0 %v520
    %716 = vmatpush.bf16.msra.mxu0 %v518
    %717 = vmatmul.bf16.gmra.mxu0 %v166
    %v718 = vpop.f32.mrf.mxu0
    %v719 = vadd.f32 %v706, %v718
    %v720 = vpop.f32.mrf.mxu0
    %721 = vdwg.mxu0
    %722 = vmatpush.bf16.msra.mxu0 %v548
    %723 = vmatpush.bf16.msra.mxu0 %v546
    %724 = vmatpush.bf16.msra.mxu0 %v544
    %725 = vmatpush.bf16.msra.mxu0 %v542
    %726 = vmatpush.bf16.msra.mxu0 %v540
    %727 = vmatpush.bf16.msra.mxu0 %v538
    %728 = vmatpush.bf16.msra.mxu0 %v536
    %729 = vmatpush.bf16.msra.mxu0 %v534
    %730 = vmatmul.bf16.gmra.mxu0 %v167
    %v731 = vpop.f32.mrf.mxu0
    %v732 = vadd.f32 %v719, %v731
    %v733 = vpop.f32.mrf.mxu0
    %734 = vdwg.mxu0
    %735 = vmatpush.bf16.msra.mxu0 %v564
    %736 = vmatpush.bf16.msra.mxu0 %v562
    %737 = vmatpush.bf16.msra.mxu0 %v560
    %738 = vmatpush.bf16.msra.mxu0 %v558
    %739 = vmatpush.bf16.msra.mxu0 %v556
    %740 = vmatpush.bf16.msra.mxu0 %v554
    %741 = vmatpush.bf16.msra.mxu0 %v552
    %742 = vmatpush.bf16.msra.mxu0 %v550
    %743 = vmatmul.bf16.gmra.mxu0 %v168
    %v744 = vpop.f32.mrf.mxu0
    %v745 = vadd.f32 %v732, %v744
    %v746 = vpop.f32.mrf.mxu0
    %747 = vdwg.mxu0
    %748 = vmatpush.bf16.msra.mxu0 0
    %749 = vmatpush.bf16.msra.mxu0 0
    %750 = vmatpush.bf16.msra.mxu0 0
    %751 = vmatpush.bf16.msra.mxu0 0
    %752 = vmatpush.bf16.msra.mxu0 0
    %753 = vmatpush.bf16.msra.mxu0 0
    %754 = vmatpush.bf16.msra.mxu0 0
    %755 = vmatpush.bf16.msra.mxu0 %v566
    %756 = vmatmul.bf16.gmra.mxu0 %v668
    %v757 = vpop.f32.mrf.mxu0
    %v758 = vadd.f32 %v745, %v757
    %v759 = vpop.f32.mrf.mxu0
    %760 = vdwg.mxu0
    %761 = vmatpush.bf16.msra.mxu0 %v485
    %762 = vmatpush.bf16.msra.mxu0 %v483
    %763 = vmatpush.bf16.msra.mxu0 %v481
    %764 = vmatpush.bf16.msra.mxu0 %v479
    %765 = vmatpush.bf16.msra.mxu0 %v477
    %766 = vmatpush.bf16.msra.mxu0 %v475
    %767 = vmatpush.bf16.msra.mxu0 %v473
    %768 = vmatpush.bf16.msra.mxu0 %v471
    %769 = vmatmul.bf16.gmra.mxu0 %v163
    %v770 = vpop.f32.mrf.mxu0
    %v771 = vadd.f32 %v149, %v770
    %v772 = vpop.f32.mrf.mxu0
    %773 = vdwg.mxu0
    %774 = vmatpush.bf16.msra.mxu0 %v501
    %775 = vmatpush.bf16.msra.mxu0 %v499
    %776 = vmatpush.bf16.msra.mxu0 %v497
    %777 = vmatpush.bf16.msra.mxu0 %v495
    %778 = vmatpush.bf16.msra.mxu0 %v493
    %779 = vmatpush.bf16.msra.mxu0 %v491
    %780 = vmatpush.bf16.msra.mxu0 %v489
    %781 = vmatpush.bf16.msra.mxu0 %v487
    %782 = vmatmul.bf16.gmra.mxu0 %v164
    %v783 = vpop.f32.mrf.mxu0
    %v784 = vadd.f32 %v771, %v783
    %v785 = vpop.f32.mrf.mxu0
    %786 = vdwg.mxu0
    %787 = vmatpush.bf16.msra.mxu0 %v517
    %788 = vmatpush.bf16.msra.mxu0 %v515
    %789 = vmatpush.bf16.msra.mxu0 %v513
    %790 = vmatpush.bf16.msra.mxu0 %v511
    %791 = vmatpush.bf16.msra.mxu0 %v509
    %792 = vmatpush.bf16.msra.mxu0 %v507
    %793 = vmatpush.bf16.msra.mxu0 %v505
    %794 = vmatpush.bf16.msra.mxu0 %v503
    %795 = vmatmul.bf16.gmra.mxu0 %v165
    %v796 = vpop.f32.mrf.mxu0
    %v797 = vadd.f32 %v784, %v796
    %v798 = vpop.f32.mrf.mxu0
    %799 = vdwg.mxu0
    %800 = vmatpush.bf16.msra.mxu0 %v533
    %801 = vmatpush.bf16.msra.mxu0 %v531
    %802 = vmatpush.bf16.msra.mxu0 %v529
    %803 = vmatpush.bf16.msra.mxu0 %v527
    %804 = vmatpush.bf16.msra.mxu0 %v525
    %805 = vmatpush.bf16.msra.mxu0 %v523
    %806 = vmatpush.bf16.msra.mxu0 %v521
    %807 = vmatpush.bf16.msra.mxu0 %v519
    %808 = vmatmul.bf16.gmra.mxu0 %v166
    %v809 = vpop.f32.mrf.mxu0
    %v810 = vadd.f32 %v797, %v809
    %v811 = vpop.f32.mrf.mxu0
    %812 = vdwg.mxu0
    %813 = vmatpush.bf16.msra.mxu0 %v549
    %814 = vmatpush.bf16.msra.mxu0 %v547
    %815 = vmatpush.bf16.msra.mxu0 %v545
    %816 = vmatpush.bf16.msra.mxu0 %v543
    %817 = vmatpush.bf16.msra.mxu0 %v541
    %818 = vmatpush.bf16.msra.mxu0 %v539
    %819 = vmatpush.bf16.msra.mxu0 %v537
    %820 = vmatpush.bf16.msra.mxu0 %v535
    %821 = vmatmul.bf16.gmra.mxu0 %v167
    %v822 = vpop.f32.mrf.mxu0
    %v823 = vadd.f32 %v810, %v822
    %v824 = vpop.f32.mrf.mxu0
    %825 = vdwg.mxu0
    %826 = vmatpush.bf16.msra.mxu0 %v565
    %827 = vmatpush.bf16.msra.mxu0 %v563
    %828 = vmatpush.bf16.msra.mxu0 %v561
    %829 = vmatpush.bf16.msra.mxu0 %v559
    %830 = vmatpush.bf16.msra.mxu0 %v557
    %831 = vmatpush.bf16.msra.mxu0 %v555
    %832 = vmatpush.bf16.msra.mxu0 %v553
    %833 = vmatpush.bf16.msra.mxu0 %v551
    %834 = vmatmul.bf16.gmra.mxu0 %v168
    %v835 = vpop.f32.mrf.mxu0
    %v836 = vadd.f32 %v823, %v835
    %v837 = vpop.f32.mrf.mxu0
    %838 = vdwg.mxu0
    %839 = vmatpush.bf16.msra.mxu0 0
    %840 = vmatpush.bf16.msra.mxu0 0
    %841 = vmatpush.bf16.msra.mxu0 0
    %842 = vmatpush.bf16.msra.mxu0 0
    %843 = vmatpush.bf16.msra.mxu0 0
    %844 = vmatpush.bf16.msra.mxu0 0
    %845 = vmatpush.bf16.msra.mxu0 0
    %846 = vmatpush.bf16.msra.mxu0 %v567
    %847 = vmatmul.bf16.gmra.mxu0 %v668
    %v848 = vpop.f32.mrf.mxu0
    %v849 = vadd.f32 %v836, %v848
    %v850 = vpop.f32.mrf.mxu0
    %851 = vdwg.mxu0
    %v852 = vmax.f32 %v758, 0.0
    %v853 = vmax.f32 %v849, 0.0
    %v854 = vpack.c.bf16 %v852, %v852
    %v855 = vpack.c.bf16 %v853, %v853
    %v856 = vld [vmem:[%s3] sm:$0xf]
    %v857 = vld [vmem:[%s3 + $0x4] sm:$0xf]
    %v858 = vld [vmem:[%s3 + $0x8] sm:$0xf]
    %v859 = vld [vmem:[%s3 + $0xc] sm:$0xf]
    %v860 = vld [vmem:[%s3 + $0x10] sm:$0xf]
    %v861 = vld [vmem:[%s3 + $0x14] sm:$0xf]
    %v862 = vld [vmem:[%s3 + $0x18] sm:$0xf]
    %v863 = vld [vmem:[%s3 + $0x1c] sm:$0xf]
    %v864 = vld [vmem:[%s3 + $0x20] sm:$0xf]
    %v865 = vld [vmem:[%s3 + $0x24] sm:$0xf]
    %v866 = vld [vmem:[%s3 + $0x28] sm:$0xf]
    %v867 = vld [vmem:[%s3 + $0x2c] sm:$0xf]
    %v868 = vld [vmem:[%s3 + $0x30] sm:$0xf]
    %v869 = vld [vmem:[%s3 + $0x34] sm:$0xf]
    %v870 = vld [vmem:[%s3 + $0x38] sm:$0xf]
    %v871 = vld [vmem:[%s3 + $0x3c] sm:$0xf]
    %v872 = vld [vmem:[%s3 + $0x40] sm:$0xf]
    %v873 = vld [vmem:[%s3 + $0x44] sm:$0xf]
    %v874 = vld [vmem:[%s3 + $0x48] sm:$0xf]
    %v875 = vld [vmem:[%s3 + $0x4c] sm:$0xf]
    %v876 = vld [vmem:[%s3 + $0x50] sm:$0xf]
    %v877 = vld [vmem:[%s3 + $0x54] sm:$0xf]
    %v878 = vld [vmem:[%s3 + $0x58] sm:$0xf]
    %v879 = vld [vmem:[%s3 + $0x5c] sm:$0xf]
    %v880 = vld [vmem:[%s3 + $0x60] sm:$0xf]
    %v881 = vld [vmem:[%s3 + $0x64] sm:$0xf]
    %v882 = vld [vmem:[%s3 + $0x68] sm:$0xf]
    %v883 = vld [vmem:[%s3 + $0x6c] sm:$0xf]
    %v884 = vld [vmem:[%s3 + $0x70] sm:$0xf]
    %v885 = vld [vmem:[%s3 + $0x74] sm:$0xf]
    %v886 = vld [vmem:[%s3 + $0x78] sm:$0xf]
    %v887 = vld [vmem:[%s3 + $0x7c] sm:$0xf]
    %v888 = vld [vmem:[%s4] sm:$0x1]
    %v890 = vperm.slane %v888, 0
    %v924 = vunpack.c.l.b16 %v856
    %v925 = vunpack.c.l.b16 %v857
    %v926 = vunpack.c.l.b16 %v858
    %v927 = vunpack.c.l.b16 %v859
    %v928 = vunpack.c.l.b16 %v860
    %v929 = vunpack.c.l.b16 %v861
    %v930 = vunpack.c.l.b16 %v862
    %v931 = vunpack.c.l.b16 %v863
    %v932 = vunpack.c.l.b16 %v864
    %v933 = vunpack.c.l.b16 %v865
    %v934 = vunpack.c.l.b16 %v866
    %v935 = vunpack.c.l.b16 %v867
    %v936 = vunpack.c.l.b16 %v868
    %v937 = vunpack.c.l.b16 %v869
    %v938 = vunpack.c.l.b16 %v870
    %v939 = vunpack.c.l.b16 %v871
    %v940 = vunpack.c.l.b16 %v872
    %v941 = vunpack.c.l.b16 %v873
    %v942 = vunpack.c.l.b16 %v874
    %v943 = vunpack.c.l.b16 %v875
    %v944 = vunpack.c.l.b16 %v876
    %v945 = vunpack.c.l.b16 %v877
    %v946 = vunpack.c.l.b16 %v878
    %v947 = vunpack.c.l.b16 %v879
    %v948 = vunpack.c.l.b16 %v880
    %v949 = vunpack.c.l.b16 %v881
    %v950 = vunpack.c.l.b16 %v882
    %v951 = vunpack.c.l.b16 %v883
    %v952 = vunpack.c.l.b16 %v884
    %v953 = vunpack.c.l.b16 %v885
    %v954 = vunpack.c.l.b16 %v886
    %v955 = vunpack.c.l.b16 %v887
    %v956 = vpack.c.b16 %v925, %v924
    %v957 = vpack.c.b16 %v927, %v926
    %v958 = vpack.c.b16 %v929, %v928
    %v959 = vpack.c.b16 %v931, %v930
    %v960 = vpack.c.b16 %v933, %v932
    %v961 = vpack.c.b16 %v935, %v934
    %v962 = vpack.c.b16 %v937, %v936
    %v963 = vpack.c.b16 %v939, %v938
    %v964 = vpack.c.b16 %v941, %v940
    %v965 = vpack.c.b16 %v943, %v942
    %v966 = vpack.c.b16 %v945, %v944
    %v967 = vpack.c.b16 %v947, %v946
    %v968 = vpack.c.b16 %v949, %v948
    %v969 = vpack.c.b16 %v951, %v950
    %v970 = vpack.c.b16 %v953, %v952
    %v971 = vpack.c.b16 %v955, %v954
    %988 = vmatpush.bf16.msra.mxu0 %v963
    %989 = vmatpush.bf16.msra.mxu0 %v962
    %990 = vmatpush.bf16.msra.mxu0 %v961
    %991 = vmatpush.bf16.msra.mxu0 %v960
    %992 = vmatpush.bf16.msra.mxu0 %v959
    %993 = vmatpush.bf16.msra.mxu0 %v958
    %994 = vmatpush.bf16.msra.mxu0 %v957
    %995 = vmatpush.bf16.msra.mxu0 %v956
    %996 = vmatmul.bf16.gmra.mxu0 %v854
    %v997 = vpop.f32.mrf.mxu0
    %v998 = vadd.f32 %v890, %v997
    %v999 = vpop.f32.mrf.mxu0
    %1000 = vdwg.mxu0
    %1001 = vmatpush.bf16.msra.mxu0 %v971
    %1002 = vmatpush.bf16.msra.mxu0 %v970
    %1003 = vmatpush.bf16.msra.mxu0 %v969
    %1004 = vmatpush.bf16.msra.mxu0 %v968
    %1005 = vmatpush.bf16.msra.mxu0 %v967
    %1006 = vmatpush.bf16.msra.mxu0 %v966
    %1007 = vmatpush.bf16.msra.mxu0 %v965
    %1008 = vmatpush.bf16.msra.mxu0 %v964
    %1009 = vmatmul.bf16.gmra.mxu0 %v855
    %v1010 = vpop.f32.mrf.mxu0
    %v1011 = vadd.f32 %v998, %v1010
    %v1012 = vpop.f32.mrf.mxu0
    %1013 = vdwg.mxu0
    %v1014 = vmax.f32 %v1011, 0.0
    %v1015 = vpack.c.bf16 %v1014, %v1014
    %v1016 = vld [vmem:[%s5] sm:$0xf]
    %v1017 = vld [vmem:[%s5 + $0x4] sm:$0xf]
    %v1018 = vld [vmem:[%s5 + $0x8] sm:$0xf]
    %v1019 = vld [vmem:[%s5 + $0xc] sm:$0xf]
    %v1020 = vld [vmem:[%s5 + $0x10] sm:$0xf]
    %v1021 = vld [vmem:[%s5 + $0x14] sm:$0xf]
    %v1022 = vld [vmem:[%s5 + $0x18] sm:$0xf]
    %v1023 = vld [vmem:[%s5 + $0x1c] sm:$0xf]
    %v1024 = vld [vmem:[%s6] sm:$0x1]
    %v1026 = vperm.slane %v1024, 0
    %v1036 = vunpack.c.l.b16 %v1016
    %v1037 = vunpack.c.l.b16 %v1017
    %v1038 = vunpack.c.l.b16 %v1018
    %v1039 = vunpack.c.l.b16 %v1019
    %v1040 = vunpack.c.l.b16 %v1020
    %v1041 = vunpack.c.l.b16 %v1021
    %v1042 = vunpack.c.l.b16 %v1022
    %v1043 = vunpack.c.l.b16 %v1023
    %v1044 = vpack.c.b16 %v1037, %v1036
    %v1045 = vpack.c.b16 %v1039, %v1038
    %v1046 = vpack.c.b16 %v1041, %v1040
    %v1047 = vpack.c.b16 %v1043, %v1042
    %vm1052 = vcmask 523264
    %v1054 = vsel %vm1052, %v1015, 0
    %1056 = vmatpush.bf16.msra.mxu0 0
    %1057 = vmatpush.bf16.msra.mxu0 0
    %1058 = vmatpush.bf16.msra.mxu0 0
    %1059 = vmatpush.bf16.msra.mxu0 0
    %1060 = vmatpush.bf16.msra.mxu0 %v1047
    %1061 = vmatpush.bf16.msra.mxu0 %v1046
    %1062 = vmatpush.bf16.msra.mxu0 %v1045
    %1063 = vmatpush.bf16.msra.mxu0 %v1044
    %1064 = vmatmul.bf16.gmra.mxu0 %v1054
    %v1065 = vpop.f32.mrf.mxu0
    %v1066 = vadd.f32 %v1026, %v1065
    %v1067 = vpop.f32.mrf.mxu0
    %1068 = vdwg.mxu0
    %1069 = vst [vmem:[#allocation5] sm:$0xff] %v1066
    // Predicated region
    $region34: #{tpu_custom_call.1} parent=1 // pred_check
      _
    $region35: #{tpu_custom_call.1} parent=1 // pred_check_branch
      %1071 = sbr.rel (0) target = $region37
    $region36: #{tpu_custom_call.1} parent=1 // pred_region
      %1073 = vsyncadd [#allocation4], 0
      %s1075 = sshll.u32 [#allocation5], 4
      %s1076 = int_to_ptr.vmem [resolvable:$true] %s1075
      %s1077 = sshll.u32 %s7, 4
      %s1078 = int_to_ptr.hbm [resolvable:$true] %s1077
      %1080 = dma.vmem_to_hbm [thread:$0]  %s1076, 128, %s1078, [#allocation4]
    $region37: #{tpu_custom_call.1} parent=1 // pred_fallthru
      _
    // Predicated region
    $region38: #{tpu_custom_call.1} parent=1 // pred_check
      _
    $region39: #{tpu_custom_call.1} parent=1 // pred_check_branch
      %1082 = sbr.rel (0) target = $region41
    $region40: #{tpu_custom_call.1} parent=1 // pred_region
      %1084 = dma.done [#allocation4], 128
    $region41: #{tpu_custom_call.1} parent=1 // pred_fallthru
      _
    %1085 = vsyncpa [#allocation3], 1
    %1086 = vsyncpa [#allocation4], 1

</llo_original>
